<compile_context>
chip_gen: v6e
topology: v6e:2x2x1
jax: 0.10.0
libtpu: 0.0.40
codegen_flags: <defaults>
</compile_context>

<pallas_src>
import functools

import jax
import jax.numpy as jnp
from jax.experimental import pallas as pl
from jax.experimental.pallas import tpu as pltpu


LANE = 128          # lane width: pad all feature dims to a multiple of this
SUBLANE = 8         # sublane width: pad/tile batch in multiples of this
MAX_TB = 512        # max batch tile (measured sweet spot for HBM roofline)


def _round_up(n, m):
    return ((n + m - 1) // m) * m


def make_fused_mlp_kernel(num_layers):
    """Fused MLP: (Linear -> LeakyReLU) * (num_layers-1) -> Linear.

    Kernel refs: x, w0, b0, w1, b1, ..., w_{L-1}, b_{L-1}, out
    All weights stored [in_pad, out_pad]; biases [1, out_pad]."""

    def kernel(x_ref, *refs):
        o_ref = refs[-1]
        wb = refs[:-1]
        h = x_ref[...]
        for i in range(num_layers):
            w = wb[2 * i][...]
            b = wb[2 * i + 1][...]
            h = jnp.dot(h, w, preferred_element_type=jnp.float32) + b
            if i < num_layers - 1:
                # torch.nn.LeakyReLU default negative_slope = 0.01
                h = jnp.where(h > 0, h, 0.01 * h)
        o_ref[...] = h.astype(o_ref.dtype)

    return kernel


def init_mlp_params(key, input_size, hidden_size, nlayers, output_size):
    """Deterministic synthetic params (unpadded). Weights stored as [in, out]."""
    params = []
    in_dim = input_size
    dims = [hidden_size] * nlayers + [output_size]
    for out_dim in dims:
        key, kw, kb = jax.random.split(key, 3)
        bound = 1.0 / jnp.sqrt(jnp.float32(in_dim))
        w = jax.random.uniform(kw, (in_dim, out_dim), jnp.float32, -bound, bound)
        b = jax.random.uniform(kb, (out_dim,), jnp.float32, -bound, bound)
        params.append((w, b))
        in_dim = out_dim
    return params


def pad_params(params):
    """Zero-pad every weight to [in_pad, out_pad] and bias to [1, out_pad]
    with all feature dims rounded up to a multiple of LANE. Done once at init."""
    padded = []
    for w, b in params:
        in_dim, out_dim = w.shape
        in_pad = _round_up(in_dim, LANE)
        out_pad = _round_up(out_dim, LANE)
        w_p = jnp.zeros((in_pad, out_pad), jnp.float32).at[:in_dim, :out_dim].set(w)
        b_p = jnp.zeros((1, out_pad), jnp.float32).at[0, :out_dim].set(b)
        padded.append((w_p, b_p))
    return padded


@functools.partial(jax.jit, static_argnames=("output_size",))
def mlp_forward(x, padded_params, output_size):
    """Fused MLP forward. x: [B, input_size] f32. Returns [B, output_size] f32."""
    B, in_dim = x.shape
    in_pad = padded_params[0][0].shape[0]
    out_pad = padded_params[-1][0].shape[1]
    num_layers = len(padded_params)

    # Pad features (lane-dense) and batch (sublane / tile multiple) with zeros.
    x_p = x
    if in_pad != in_dim:
        x_p = jnp.pad(x_p, ((0, 0), (0, in_pad - in_dim)))
    tb = min(_round_up(B, SUBLANE), MAX_TB)
    b_pad = _round_up(B, tb)
    if b_pad != B:
        x_p = jnp.pad(x_p, ((0, b_pad - B), (0, 0)))

    flat = []
    for w_p, bias_p in padded_params:
        flat.append(w_p)
        flat.append(bias_p)

    kernel = make_fused_mlp_kernel(num_layers)
    out_shape = jax.ShapeDtypeStruct((b_pad, out_pad), jnp.float32)

    flops = 2 * b_pad * sum(int(w.shape[0]) * int(w.shape[1]) for w, _ in padded_params)
    bytes_accessed = 4 * (
        b_pad * in_pad
        + sum(int(w.size) + int(bb.size) for w, bb in padded_params)
        + b_pad * out_pad
    )
    cost = pl.CostEstimate(flops=flops, transcendentals=0, bytes_accessed=bytes_accessed)

    grid_n = b_pad // tb
    if grid_n == 1:
        # Tiny batch: no grid, everything a full-array VMEM block.
        out_p = pl.pallas_call(
            kernel,
            out_shape=out_shape,
            in_specs=[pl.BlockSpec(memory_space=pltpu.MemorySpace.VMEM)] * (1 + len(flat)),
            out_specs=pl.BlockSpec(memory_space=pltpu.MemorySpace.VMEM),
            cost_estimate=cost,
        )(x_p, *flat)
    else:
        # Large batch: tile the batch axis, keep weights/biases resident.
        in_specs = [pl.BlockSpec((tb, in_pad), lambda i: (i, 0))]
        for w_p, bias_p in padded_params:
            in_specs.append(pl.BlockSpec(w_p.shape, lambda i: (0, 0)))
            in_specs.append(pl.BlockSpec(bias_p.shape, lambda i: (0, 0)))
        out_p = pl.pallas_call(
            kernel,
            out_shape=out_shape,
            grid=(grid_n,),
            in_specs=in_specs,
            out_specs=pl.BlockSpec((tb, out_pad), lambda i: (i, 0)),
            compiler_params=pltpu.CompilerParams(
                dimension_semantics=("parallel",),  # shards across v7x's 2 TCs; no-op on v5e/v6e
            ),
            cost_estimate=cost,
        )(x_p, *flat)

    return out_p[:B, :output_size]


def mlp_reference(x, params):
    h = x
    n = len(params)
    for i, (w, b) in enumerate(params):
        h = h @ w + b
        if i < n - 1:
            h = jnp.where(h > 0, h, 0.01 * h)
    return h


if __name__ == "__main__":
    # Small shapes consistent with the module: x is [batch, input_size]
    batch = 8
    input_size = 16
    hidden_size = 32
    nlayers = 2
    output_size = 4

    key = jax.random.PRNGKey(0)
    key, kx = jax.random.split(key)
    x = jax.random.normal(kx, (batch, input_size), jnp.float32)

    params = init_mlp_params(key, input_size, hidden_size, nlayers, output_size)
    padded = pad_params(params)

    # Small-batch (no-grid) path.
    out = mlp_forward(x, padded, output_size)
    out = jax.block_until_ready(out)
    ref = mlp_reference(x, params)
    assert out.shape == (batch, output_size)
    assert jnp.allclose(out, ref, atol=1e-5, rtol=1e-5)

    # Larger batch exercises the batch-tiled ("parallel") path.
    key, kx2 = jax.random.split(key)
    x_big = jax.random.normal(kx2, (1024, input_size), jnp.float32)
    out_big = jax.block_until_ready(mlp_forward(x_big, padded, output_size))
    ref_big = mlp_reference(x_big, params)
    assert out_big.shape == (1024, output_size)
    assert jnp.allclose(out_big, ref_big, atol=1e-4, rtol=1e-4)

    print("KERNEL_OK")
</pallas_src>

<mosaic_0001>
module attributes {stable_mosaic.version = 11 : i64} {
  func.func @kernel(%arg0: memref<8x128xf32, #tpu.memory_space<vmem>>, %arg1: memref<128x128xf32, #tpu.memory_space<vmem>>, %arg2: memref<1x128xf32, #tpu.memory_space<vmem>>, %arg3: memref<128x128xf32, #tpu.memory_space<vmem>>, %arg4: memref<1x128xf32, #tpu.memory_space<vmem>>, %arg5: memref<128x128xf32, #tpu.memory_space<vmem>>, %arg6: memref<1x128xf32, #tpu.memory_space<vmem>>, %arg7: memref<8x128xf32, #tpu.memory_space<vmem>>) attributes {dimension_semantics = [], scalar_prefetch = 0 : i64, scratch_operands = 0 : i64, tpu.core_type = #tpu.core_type<tc>} {
    %c0 = arith.constant 0 : index
    %c0_0 = arith.constant 0 : index
    %0 = vector.load %arg0[%c0, %c0_0] : memref<8x128xf32, #tpu.memory_space<vmem>>, vector<8x128xf32>
    %c0_1 = arith.constant 0 : index
    %c0_2 = arith.constant 0 : index
    %1 = vector.load %arg1[%c0_1, %c0_2] : memref<128x128xf32, #tpu.memory_space<vmem>>, vector<128x128xf32>
    %c0_3 = arith.constant 0 : index
    %c0_4 = arith.constant 0 : index
    %2 = vector.load %arg2[%c0_3, %c0_4] : memref<1x128xf32, #tpu.memory_space<vmem>>, vector<1x128xf32>
    %cst = arith.constant dense<0.000000e+00> : vector<8x128xf32>
    %3 = tpu.matmul %0, %1, %cst {dimension_numbers = #tpu.dot_dimension_numbers<[1], [0], [0], [1], [0, 0, 1, 1], [], []>} : vector<8x128xf32>, vector<128x128xf32>, vector<8x128xf32> -> vector<8x128xf32>
    %4 = vector.broadcast %2 : vector<1x128xf32> to vector<8x128xf32>
    %5 = arith.addf %3, %4 : vector<8x128xf32>
    %cst_5 = arith.constant 0.000000e+00 : f32
    %6 = vector.broadcast %cst_5 : f32 to vector<8x128xf32>
    %7 = arith.cmpf ogt, %5, %6 : vector<8x128xf32>
    %cst_6 = arith.constant 0.00999999977 : f32
    %8 = vector.broadcast %cst_6 : f32 to vector<8x128xf32>
    %9 = arith.mulf %8, %5 : vector<8x128xf32>
    %10 = arith.select %7, %5, %9 : vector<8x128xi1>, vector<8x128xf32>
    %c0_7 = arith.constant 0 : index
    %c0_8 = arith.constant 0 : index
    %11 = vector.load %arg3[%c0_7, %c0_8] : memref<128x128xf32, #tpu.memory_space<vmem>>, vector<128x128xf32>
    %c0_9 = arith.constant 0 : index
    %c0_10 = arith.constant 0 : index
    %12 = vector.load %arg4[%c0_9, %c0_10] : memref<1x128xf32, #tpu.memory_space<vmem>>, vector<1x128xf32>
    %cst_11 = arith.constant dense<0.000000e+00> : vector<8x128xf32>
    %13 = tpu.matmul %10, %11, %cst_11 {dimension_numbers = #tpu.dot_dimension_numbers<[1], [0], [0], [1], [0, 0, 1, 1], [], []>} : vector<8x128xf32>, vector<128x128xf32>, vector<8x128xf32> -> vector<8x128xf32>
    %14 = vector.broadcast %12 : vector<1x128xf32> to vector<8x128xf32>
    %15 = arith.addf %13, %14 : vector<8x128xf32>
    %cst_12 = arith.constant 0.000000e+00 : f32
    %16 = vector.broadcast %cst_12 : f32 to vector<8x128xf32>
    %17 = arith.cmpf ogt, %15, %16 : vector<8x128xf32>
    %cst_13 = arith.constant 0.00999999977 : f32
    %18 = vector.broadcast %cst_13 : f32 to vector<8x128xf32>
    %19 = arith.mulf %18, %15 : vector<8x128xf32>
    %20 = arith.select %17, %15, %19 : vector<8x128xi1>, vector<8x128xf32>
    %c0_14 = arith.constant 0 : index
    %c0_15 = arith.constant 0 : index
    %21 = vector.load %arg5[%c0_14, %c0_15] : memref<128x128xf32, #tpu.memory_space<vmem>>, vector<128x128xf32>
    %c0_16 = arith.constant 0 : index
    %c0_17 = arith.constant 0 : index
    %22 = vector.load %arg6[%c0_16, %c0_17] : memref<1x128xf32, #tpu.memory_space<vmem>>, vector<1x128xf32>
    %cst_18 = arith.constant dense<0.000000e+00> : vector<8x128xf32>
    %23 = tpu.matmul %20, %21, %cst_18 {dimension_numbers = #tpu.dot_dimension_numbers<[1], [0], [0], [1], [0, 0, 1, 1], [], []>} : vector<8x128xf32>, vector<128x128xf32>, vector<8x128xf32> -> vector<8x128xf32>
    %24 = vector.broadcast %22 : vector<1x128xf32> to vector<8x128xf32>
    %25 = arith.addf %23, %24 : vector<8x128xf32>
    %c0_19 = arith.constant 0 : index
    %c0_20 = arith.constant 0 : index
    %26 = vector.load %arg7[%c0_19, %c0_20] : memref<8x128xf32, #tpu.memory_space<vmem>>, vector<8x128xf32>
    tpu.vector_store %arg7[%c0_19, %c0_20], %25 {strides = array<i32>} : memref<8x128xf32, #tpu.memory_space<vmem>>, vector<8x128xf32>,
    return
  }
}

</mosaic_0001>

<llo_original>
// kernel: mlp_forward.1
$region0: #{mlp_forward.1}
  #allocation0 [shape = 'u32[]', space=smem, size = 0x4, offset = 0x4, fixed_abs, tag = 'smem constant byte address 0x4 - core index']
  #allocation1 [shape = 'u32[144,128]{1,0:T(1,128)}', space=vmem, size = 0x12000, scoped, tag = 'internal scratch']
  %s0 = inlined_call_operand.vmem [shape: f32[8,128], index: 0, kind: input, shape index: {}]
  %s1 = inlined_call_operand.hbm [shape: f32[128,128], index: 1, kind: input, shape index: {}]
  %s2 = inlined_call_operand.vmem [shape: f32[1,128], index: 2, kind: input, shape index: {}]
  %s3 = inlined_call_operand.hbm [shape: f32[128,128], index: 3, kind: input, shape index: {}]
  %s4 = inlined_call_operand.vmem [shape: f32[1,128], index: 4, kind: input, shape index: {}]
  %s5 = inlined_call_operand.hbm [shape: f32[128,128], index: 5, kind: input, shape index: {}]
  %s6 = inlined_call_operand.vmem [shape: f32[1,128], index: 6, kind: input, shape index: {}]
  %s7 = inlined_call_operand.vmem [shape: f32[8,128], index: 7, kind: output, shape index: {}]
  %s8 = sld [smem:[#allocation0]]
  $region50: #{mlp_forward.1} parent=0
    _
  %s10 = ssub.s32 1, %s8
  %s11 = scalar_select 0, %s10, %s8
  $region1: #{mlp_forward.1} parent=0
    #allocation2 [shape = 'u8[65536]{0}', space=vmem, size = 0x10000, scoped, tag = 'input window, operand 1, single buffered']
    #allocation3 [shape = 's32[1]{0}', space=sflag, size = 0x4, scoped, tag = 'scoped memory for mlp_forward.1']
    #allocation4 [shape = 'u8[65536]{0}', space=vmem, size = 0x10000, scoped, tag = 'input window, operand 3, single buffered']
    #allocation5 [shape = 's32[1]{0}', space=sflag, size = 0x4, scoped, tag = 'scoped memory for mlp_forward.1']
    #allocation6 [shape = 'u8[65536]{0}', space=vmem, size = 0x10000, scoped, tag = 'input window, operand 5, single buffered']
    %12 = vsyncpa [#allocation3], 0
    %13 = vsyncpa [#allocation5], 0
    // Predicated region
    $region2: #{mlp_forward.1} parent=1 // pred_check
      _
    $region3: #{mlp_forward.1} parent=1 // pred_check_branch
      %15 = sbr.rel (0) target = $region5
    $region4: #{mlp_forward.1} parent=1 // pred_region
      _
    $region5: #{mlp_forward.1} parent=1 // pred_fallthru
      _
    // Predicated region
    $region6: #{mlp_forward.1} parent=1 // pred_check
      _
    $region7: #{mlp_forward.1} parent=1 // pred_check_branch
      %17 = sbr.rel (0) target = $region9
    $region8: #{mlp_forward.1} parent=1 // pred_region
      %s19 = ssub.s32 2048, 2048
      %20 = vsyncadd [#allocation3], %s19
      %s21 = sshll.u32 [#allocation2], 4
      %s22 = int_to_ptr.vmem [resolvable:$true] %s21
      %27 = dma.hbm_to_vmem [thread:$0]  %s1, 2048, %s22, [#allocation3], 128, 128, 8
    $region9: #{mlp_forward.1} parent=1 // pred_fallthru
      _
    // Predicated region
    $region10: #{mlp_forward.1} parent=1 // pred_check
      _
    $region11: #{mlp_forward.1} parent=1 // pred_check_branch
      %29 = sbr.rel (0) target = $region13
    $region12: #{mlp_forward.1} parent=1 // pred_region
      _
    $region13: #{mlp_forward.1} parent=1 // pred_fallthru
      _
    // Predicated region
    $region14: #{mlp_forward.1} parent=1 // pred_check
      _
    $region15: #{mlp_forward.1} parent=1 // pred_check_branch
      %31 = sbr.rel (0) target = $region17
    $region16: #{mlp_forward.1} parent=1 // pred_region
      %s33 = ssub.s32 2048, 2048
      %34 = vsyncadd [#allocation5], %s33
      %s35 = sshll.u32 [#allocation4], 4
      %s36 = int_to_ptr.vmem [resolvable:$true] %s35
      %41 = dma.hbm_to_vmem [thread:$0]  %s3, 2048, %s36, [#allocation5], 128, 128, 8
    $region17: #{mlp_forward.1} parent=1 // pred_fallthru
      _
    // Predicated region
    $region18: #{mlp_forward.1} parent=1 // pred_check
      _
    $region19: #{mlp_forward.1} parent=1 // pred_check_branch
      %43 = sbr.rel (0) target = $region21
    $region20: #{mlp_forward.1} parent=1 // pred_region
      _
    $region21: #{mlp_forward.1} parent=1 // pred_fallthru
      _
    // Predicated region
    $region22: #{mlp_forward.1} parent=1 // pred_check
      _
    $region23: #{mlp_forward.1} parent=1 // pred_check_branch
      %45 = sbr.rel (0) target = $region25
    $region24: #{mlp_forward.1} parent=1 // pred_region
      %s47 = ssub.s32 2048, 2048
      %48 = vsyncadd [#allocation5], %s47
      %s49 = sshll.u32 [#allocation6], 4
      %s50 = int_to_ptr.vmem [resolvable:$true] %s49
      %55 = dma.hbm_to_vmem [thread:$0]  %s5, 2048, %s50, [#allocation5], 128, 128, 8
    $region25: #{mlp_forward.1} parent=1 // pred_fallthru
      _
    // Predicated region
    $region26: #{mlp_forward.1} parent=1 // pred_check
      _
    $region27: #{mlp_forward.1} parent=1 // pred_check_branch
      %57 = sbr.rel (0) target = $region29
    $region28: #{mlp_forward.1} parent=1 // pred_region
      _
    $region29: #{mlp_forward.1} parent=1 // pred_fallthru
      _
    // Predicated region
    $region30: #{mlp_forward.1} parent=1 // pred_check
      _
    $region31: #{mlp_forward.1} parent=1 // pred_check_branch
      %59 = sbr.rel (0) target = $region33
    $region32: #{mlp_forward.1} parent=1 // pred_region
      %60 = dma.done [#allocation3], 2048
    $region33: #{mlp_forward.1} parent=1 // pred_fallthru
      _
    // Predicated region
    $region34: #{mlp_forward.1} parent=1 // pred_check
      _
    $region35: #{mlp_forward.1} parent=1 // pred_check_branch
      %62 = sbr.rel (0) target = $region37
    $region36: #{mlp_forward.1} parent=1 // pred_region
      %63 = dma.done [#allocation5], 2048
    $region37: #{mlp_forward.1} parent=1 // pred_fallthru
      _
    // Predicated region
    $region38: #{mlp_forward.1} parent=1 // pred_check
      _
    $region39: #{mlp_forward.1} parent=1 // pred_check_branch
      %65 = sbr.rel (0) target = $region41
    $region40: #{mlp_forward.1} parent=1 // pred_region
      %66 = dma.done [#allocation5], 2048
    $region41: #{mlp_forward.1} parent=1 // pred_fallthru
      _
    %v67 = vld [vmem:[%s0] sm:$0xff]
    %v68 = vld [vmem:[#allocation2] sm:$0xff]
    %v69 = vld [vmem:[#allocation2 + $0x8] sm:$0xff]
    %v70 = vld [vmem:[#allocation2 + $0x10] sm:$0xff]
    %v71 = vld [vmem:[#allocation2 + $0x18] sm:$0xff]
    %v72 = vld [vmem:[#allocation2 + $0x20] sm:$0xff]
    %v73 = vld [vmem:[#allocation2 + $0x28] sm:$0xff]
    %v74 = vld [vmem:[#allocation2 + $0x30] sm:$0xff]
    %v75 = vld [vmem:[#allocation2 + $0x38] sm:$0xff]
    %v76 = vld [vmem:[#allocation2 + $0x40] sm:$0xff]
    %v77 = vld [vmem:[#allocation2 + $0x48] sm:$0xff]
    %v78 = vld [vmem:[#allocation2 + $0x50] sm:$0xff]
    %v79 = vld [vmem:[#allocation2 + $0x58] sm:$0xff]
    %v80 = vld [vmem:[#allocation2 + $0x60] sm:$0xff]
    %v81 = vld [vmem:[#allocation2 + $0x68] sm:$0xff]
    %v82 = vld [vmem:[#allocation2 + $0x70] sm:$0xff]
    %v83 = vld [vmem:[#allocation2 + $0x78] sm:$0xff]
    %v84 = vld [vmem:[%s2] sm:$0x1]
    %v86 = vlaneseq
    %v87 = vshrl.u32 %v86, 7
    %v88 = vsub.s32 0, %v87
    %v89 = vrot.slane %v84, %v88
    %91 = vmatprep.subr.mxu0 0.0
    %92 = vmatpush1.msra.mxu0 %v83
    %93 = vmatprep.subr.mxu0 0.0
    %94 = vmatpush1.msra.mxu0 %v82
    %95 = vmatprep.subr.mxu0 0.0
    %96 = vmatpush1.msra.mxu0 %v81
    %97 = vmatprep.subr.mxu0 0.0
    %98 = vmatpush1.msra.mxu0 %v80
    %99 = vmatprep.subr.mxu0 0.0
    %100 = vmatpush1.msra.mxu0 %v79
    %101 = vmatprep.subr.mxu0 0.0
    %102 = vmatpush1.msra.mxu0 %v78
    %103 = vmatprep.subr.mxu0 0.0
    %104 = vmatpush1.msra.mxu0 %v77
    %105 = vmatprep.subr.mxu0 0.0
    %106 = vmatpush1.msra.mxu0 %v76
    %107 = vmatprep.subr.mxu0 0.0
    %108 = vmatpush1.msra.mxu0 %v75
    %109 = vmatprep.subr.mxu0 0.0
    %110 = vmatpush1.msra.mxu0 %v74
    %111 = vmatprep.subr.mxu0 0.0
    %112 = vmatpush1.msra.mxu0 %v73
    %113 = vmatprep.subr.mxu0 0.0
    %114 = vmatpush1.msra.mxu0 %v72
    %115 = vmatprep.subr.mxu0 0.0
    %116 = vmatpush1.msra.mxu0 %v71
    %117 = vmatprep.subr.mxu0 0.0
    %118 = vmatpush1.msra.mxu0 %v70
    %119 = vmatprep.subr.mxu0 0.0
    %120 = vmatpush1.msra.mxu0 %v69
    %121 = vmatprep.subr.mxu0 0.0
    %122 = vmatpush1.msra.mxu0 %v68
    %123 = vmatprep.subr.mxu0 0.0
    %124 = vmatpush2.msra.mxu0 0.0
    %125 = vmatprep.subr.mxu0 0.0
    %126 = vmatpush2.msra.mxu0 0.0
    %127 = vmatprep.subr.mxu0 0.0
    %128 = vmatpush2.msra.mxu0 0.0
    %129 = vmatprep.subr.mxu0 0.0
    %130 = vmatpush2.msra.mxu0 0.0
    %131 = vmatprep.subr.mxu0 0.0
    %132 = vmatpush2.msra.mxu0 0.0
    %133 = vmatprep.subr.mxu0 0.0
    %134 = vmatpush2.msra.mxu0 0.0
    %135 = vmatprep.subr.mxu0 0.0
    %136 = vmatpush2.msra.mxu0 0.0
    %137 = vmatprep.subr.mxu0 0.0
    %138 = vmatpush2.msra.mxu0 0.0
    %139 = vmatprep.subr.mxu0 0.0
    %140 = vmatpush2.msra.mxu0 0.0
    %141 = vmatprep.subr.mxu0 0.0
    %142 = vmatpush2.msra.mxu0 0.0
    %143 = vmatprep.subr.mxu0 0.0
    %144 = vmatpush2.msra.mxu0 0.0
    %145 = vmatprep.subr.mxu0 0.0
    %146 = vmatpush2.msra.mxu0 0.0
    %147 = vmatprep.subr.mxu0 0.0
    %148 = vmatpush2.msra.mxu0 0.0
    %149 = vmatprep.subr.mxu0 0.0
    %150 = vmatpush2.msra.mxu0 0.0
    %151 = vmatprep.subr.mxu0 0.0
    %152 = vmatpush2.msra.mxu0 0.0
    %153 = vmatprep.subr.mxu0 0.0
    %154 = vmatpush2.msra.mxu0 0.0
    %155 = vmatprep.mubr.f32.mxu0 0.0
    %156 = vmatmul.mubr.f32.gmra.mxu0 %v67
    %v157 = vpop.f32.mrf.mxu0
    %v158 = vadd.f32 %v89, %v157
    %v159 = vpop.f32.mrf.mxu0
    %160 = vdwg.mxu0
    %vm161 = vcmp.gt.f32.partialorder %v158, 0.0
    %v162 = vmul.f32 %v158, 0.01
    %v163 = vsel %vm161, %v158, %v162
    %v164 = vld [vmem:[#allocation4] sm:$0xff]
    %v165 = vld [vmem:[#allocation4 + $0x8] sm:$0xff]
    %v166 = vld [vmem:[#allocation4 + $0x10] sm:$0xff]
    %v167 = vld [vmem:[#allocation4 + $0x18] sm:$0xff]
    %v168 = vld [vmem:[#allocation4 + $0x20] sm:$0xff]
    %v169 = vld [vmem:[#allocation4 + $0x28] sm:$0xff]
    %v170 = vld [vmem:[#allocation4 + $0x30] sm:$0xff]
    %v171 = vld [vmem:[#allocation4 + $0x38] sm:$0xff]
    %v172 = vld [vmem:[#allocation4 + $0x40] sm:$0xff]
    %v173 = vld [vmem:[#allocation4 + $0x48] sm:$0xff]
    %v174 = vld [vmem:[#allocation4 + $0x50] sm:$0xff]
    %v175 = vld [vmem:[#allocation4 + $0x58] sm:$0xff]
    %v176 = vld [vmem:[#allocation4 + $0x60] sm:$0xff]
    %v177 = vld [vmem:[#allocation4 + $0x68] sm:$0xff]
    %v178 = vld [vmem:[#allocation4 + $0x70] sm:$0xff]
    %v179 = vld [vmem:[#allocation4 + $0x78] sm:$0xff]
    %v180 = vld [vmem:[%s4] sm:$0x1]
    %v182 = vlaneseq
    %v183 = vshrl.u32 %v182, 7
    %v184 = vsub.s32 0, %v183
    %v185 = vrot.slane %v180, %v184
    %187 = vmatprep.subr.mxu0 0.0
    %188 = vmatpush1.msra.mxu0 %v179
    %189 = vmatprep.subr.mxu0 0.0
    %190 = vmatpush1.msra.mxu0 %v178
    %191 = vmatprep.subr.mxu0 0.0
    %192 = vmatpush1.msra.mxu0 %v177
    %193 = vmatprep.subr.mxu0 0.0
    %194 = vmatpush1.msra.mxu0 %v176
    %195 = vmatprep.subr.mxu0 0.0
    %196 = vmatpush1.msra.mxu0 %v175
    %197 = vmatprep.subr.mxu0 0.0
    %198 = vmatpush1.msra.mxu0 %v174
    %199 = vmatprep.subr.mxu0 0.0
    %200 = vmatpush1.msra.mxu0 %v173
    %201 = vmatprep.subr.mxu0 0.0
    %202 = vmatpush1.msra.mxu0 %v172
    %203 = vmatprep.subr.mxu0 0.0
    %204 = vmatpush1.msra.mxu0 %v171
    %205 = vmatprep.subr.mxu0 0.0
    %206 = vmatpush1.msra.mxu0 %v170
    %207 = vmatprep.subr.mxu0 0.0
    %208 = vmatpush1.msra.mxu0 %v169
    %209 = vmatprep.subr.mxu0 0.0
    %210 = vmatpush1.msra.mxu0 %v168
    %211 = vmatprep.subr.mxu0 0.0
    %212 = vmatpush1.msra.mxu0 %v167
    %213 = vmatprep.subr.mxu0 0.0
    %214 = vmatpush1.msra.mxu0 %v166
    %215 = vmatprep.subr.mxu0 0.0
    %216 = vmatpush1.msra.mxu0 %v165
    %217 = vmatprep.subr.mxu0 0.0
    %218 = vmatpush1.msra.mxu0 %v164
    %219 = vmatprep.subr.mxu0 0.0
    %220 = vmatpush2.msra.mxu0 0.0
    %221 = vmatprep.subr.mxu0 0.0
    %222 = vmatpush2.msra.mxu0 0.0
    %223 = vmatprep.subr.mxu0 0.0
    %224 = vmatpush2.msra.mxu0 0.0
    %225 = vmatprep.subr.mxu0 0.0
    %226 = vmatpush2.msra.mxu0 0.0
    %227 = vmatprep.subr.mxu0 0.0
    %228 = vmatpush2.msra.mxu0 0.0
    %229 = vmatprep.subr.mxu0 0.0
    %230 = vmatpush2.msra.mxu0 0.0
    %231 = vmatprep.subr.mxu0 0.0
    %232 = vmatpush2.msra.mxu0 0.0
    %233 = vmatprep.subr.mxu0 0.0
    %234 = vmatpush2.msra.mxu0 0.0
    %235 = vmatprep.subr.mxu0 0.0
    %236 = vmatpush2.msra.mxu0 0.0
    %237 = vmatprep.subr.mxu0 0.0
    %238 = vmatpush2.msra.mxu0 0.0
    %239 = vmatprep.subr.mxu0 0.0
    %240 = vmatpush2.msra.mxu0 0.0
    %241 = vmatprep.subr.mxu0 0.0
    %242 = vmatpush2.msra.mxu0 0.0
    %243 = vmatprep.subr.mxu0 0.0
    %244 = vmatpush2.msra.mxu0 0.0
    %245 = vmatprep.subr.mxu0 0.0
    %246 = vmatpush2.msra.mxu0 0.0
    %247 = vmatprep.subr.mxu0 0.0
    %248 = vmatpush2.msra.mxu0 0.0
    %249 = vmatprep.subr.mxu0 0.0
    %250 = vmatpush2.msra.mxu0 0.0
    %251 = vmatprep.mubr.f32.mxu0 0.0
    %252 = vmatmul.mubr.f32.gmra.mxu0 %v163
    %v253 = vpop.f32.mrf.mxu0
    %v254 = vadd.f32 %v185, %v253
    %v255 = vpop.f32.mrf.mxu0
    %256 = vdwg.mxu0
    %vm257 = vcmp.gt.f32.partialorder %v254, 0.0
    %v258 = vmul.f32 %v254, 0.01
    %v259 = vsel %vm257, %v254, %v258
    %v260 = vld [vmem:[#allocation6] sm:$0xff]
    %v261 = vld [vmem:[#allocation6 + $0x8] sm:$0xff]
    %v262 = vld [vmem:[#allocation6 + $0x10] sm:$0xff]
    %v263 = vld [vmem:[#allocation6 + $0x18] sm:$0xff]
    %v264 = vld [vmem:[#allocation6 + $0x20] sm:$0xff]
    %v265 = vld [vmem:[#allocation6 + $0x28] sm:$0xff]
    %v266 = vld [vmem:[#allocation6 + $0x30] sm:$0xff]
    %v267 = vld [vmem:[#allocation6 + $0x38] sm:$0xff]
    %v268 = vld [vmem:[#allocation6 + $0x40] sm:$0xff]
    %v269 = vld [vmem:[#allocation6 + $0x48] sm:$0xff]
    %v270 = vld [vmem:[#allocation6 + $0x50] sm:$0xff]
    %v271 = vld [vmem:[#allocation6 + $0x58] sm:$0xff]
    %v272 = vld [vmem:[#allocation6 + $0x60] sm:$0xff]
    %v273 = vld [vmem:[#allocation6 + $0x68] sm:$0xff]
    %v274 = vld [vmem:[#allocation6 + $0x70] sm:$0xff]
    %v275 = vld [vmem:[#allocation6 + $0x78] sm:$0xff]
    %v276 = vld [vmem:[%s6] sm:$0x1]
    %v278 = vlaneseq
    %v279 = vshrl.u32 %v278, 7
    %v280 = vsub.s32 0, %v279
    %v281 = vrot.slane %v276, %v280
    %283 = vmatprep.subr.mxu0 0.0
    %284 = vmatpush1.msra.mxu0 %v275
    %285 = vmatprep.subr.mxu0 0.0
    %286 = vmatpush1.msra.mxu0 %v274
    %287 = vmatprep.subr.mxu0 0.0
    %288 = vmatpush1.msra.mxu0 %v273
    %289 = vmatprep.subr.mxu0 0.0
    %290 = vmatpush1.msra.mxu0 %v272
    %291 = vmatprep.subr.mxu0 0.0
    %292 = vmatpush1.msra.mxu0 %v271
    %293 = vmatprep.subr.mxu0 0.0
    %294 = vmatpush1.msra.mxu0 %v270
    %295 = vmatprep.subr.mxu0 0.0
    %296 = vmatpush1.msra.mxu0 %v269
    %297 = vmatprep.subr.mxu0 0.0
    %298 = vmatpush1.msra.mxu0 %v268
    %299 = vmatprep.subr.mxu0 0.0
    %300 = vmatpush1.msra.mxu0 %v267
    %301 = vmatprep.subr.mxu0 0.0
    %302 = vmatpush1.msra.mxu0 %v266
    %303 = vmatprep.subr.mxu0 0.0
    %304 = vmatpush1.msra.mxu0 %v265
    %305 = vmatprep.subr.mxu0 0.0
    %306 = vmatpush1.msra.mxu0 %v264
    %307 = vmatprep.subr.mxu0 0.0
    %308 = vmatpush1.msra.mxu0 %v263
    %309 = vmatprep.subr.mxu0 0.0
    %310 = vmatpush1.msra.mxu0 %v262
    %311 = vmatprep.subr.mxu0 0.0
    %312 = vmatpush1.msra.mxu0 %v261
    %313 = vmatprep.subr.mxu0 0.0
    %314 = vmatpush1.msra.mxu0 %v260
    %315 = vmatprep.subr.mxu0 0.0
    %316 = vmatpush2.msra.mxu0 0.0
    %317 = vmatprep.subr.mxu0 0.0
    %318 = vmatpush2.msra.mxu0 0.0
    %319 = vmatprep.subr.mxu0 0.0
    %320 = vmatpush2.msra.mxu0 0.0
    %321 = vmatprep.subr.mxu0 0.0
    %322 = vmatpush2.msra.mxu0 0.0
    %323 = vmatprep.subr.mxu0 0.0
    %324 = vmatpush2.msra.mxu0 0.0
    %325 = vmatprep.subr.mxu0 0.0
    %326 = vmatpush2.msra.mxu0 0.0
    %327 = vmatprep.subr.mxu0 0.0
    %328 = vmatpush2.msra.mxu0 0.0
    %329 = vmatprep.subr.mxu0 0.0
    %330 = vmatpush2.msra.mxu0 0.0
    %331 = vmatprep.subr.mxu0 0.0
    %332 = vmatpush2.msra.mxu0 0.0
    %333 = vmatprep.subr.mxu0 0.0
    %334 = vmatpush2.msra.mxu0 0.0
    %335 = vmatprep.subr.mxu0 0.0
    %336 = vmatpush2.msra.mxu0 0.0
    %337 = vmatprep.subr.mxu0 0.0
    %338 = vmatpush2.msra.mxu0 0.0
    %339 = vmatprep.subr.mxu0 0.0
    %340 = vmatpush2.msra.mxu0 0.0
    %341 = vmatprep.subr.mxu0 0.0
    %342 = vmatpush2.msra.mxu0 0.0
    %343 = vmatprep.subr.mxu0 0.0
    %344 = vmatpush2.msra.mxu0 0.0
    %345 = vmatprep.subr.mxu0 0.0
    %346 = vmatpush2.msra.mxu0 0.0
    %347 = vmatprep.mubr.f32.mxu0 0.0
    %348 = vmatmul.mubr.f32.gmra.mxu0 %v259
    %v349 = vpop.f32.mrf.mxu0
    %v350 = vadd.f32 %v281, %v349
    %v351 = vpop.f32.mrf.mxu0
    %352 = vdwg.mxu0
    %353 = vst [vmem:[%s7] sm:$0xff] %v350
    // Predicated region
    $region42: #{mlp_forward.1} parent=1 // pred_check
      _
    $region43: #{mlp_forward.1} parent=1 // pred_check_branch
      %355 = sbr.rel (0) target = $region45
    $region44: #{mlp_forward.1} parent=1 // pred_region
      _
    $region45: #{mlp_forward.1} parent=1 // pred_fallthru
      _
    // Predicated region
    $region46: #{mlp_forward.1} parent=1 // pred_check
      _
    $region47: #{mlp_forward.1} parent=1 // pred_check_branch
      %357 = sbr.rel (0) target = $region49
    $region48: #{mlp_forward.1} parent=1 // pred_region
      _
    $region49: #{mlp_forward.1} parent=1 // pred_fallthru
      _
    %358 = vsyncpa [#allocation3], 1
    %359 = vsyncpa [#allocation5], 1

</llo_original>
